<compile_context>
chip_gen: v6e
topology: v6e:2x2x1
jax: 0.10.0
libtpu: 0.0.40
codegen_flags: <defaults>
</compile_context>

<pallas_src>
import jax
import jax.numpy as jnp
from jax import lax
from jax.experimental import pallas as pl
from jax.experimental.pallas import tpu as pltpu

EPS = 1e-5


# ---------------------------------------------------------------------------
# Phase 1: per-(channel*row) sum and sum-of-squares, accumulated over batch.
# ---------------------------------------------------------------------------
def stats_kernel(x_ref, sum_ref, sq_ref):
    # x_ref:   (1, C*H, W) block for batch element n
    # sum_ref: (C*H, 1)    resident accumulator (same block for every n)
    # sq_ref:  (C*H, 1)    resident accumulator
    n = pl.program_id(0)

    x = x_ref[0].astype(jnp.float32)                 # (C*H, W)
    s = jnp.sum(x, axis=-1, keepdims=True)           # (C*H, 1)
    s2 = jnp.sum(x * x, axis=-1, keepdims=True)      # (C*H, 1)

    @pl.when(n == 0)
    def _():
        sum_ref[...] = jnp.zeros_like(sum_ref)
        sq_ref[...] = jnp.zeros_like(sq_ref)

    sum_ref[...] += s
    sq_ref[...] += s2


# ---------------------------------------------------------------------------
# Phase 2: fused BN (single FMA) + ReLU + 1x1 conv + 2x2 avg-pool (as matmuls).
# ---------------------------------------------------------------------------
def apply_kernel(x_ref, a_ref, b_ref, s_ref, q_ref, o_ref):
    # x_ref: (1, C*H, W)         input slab for batch element n
    # a_ref: (C*H, 1)            per-channel BN scale, repeated over H rows
    # b_ref: (C*H, 1)            per-channel BN shift, repeated over H rows
    # s_ref: (C_out*Ho, C*H)     kron(conv_weight, H-pooling matrix)
    # q_ref: (W, Wo)             W-pooling matrix
    # o_ref: (1, C_out*Ho, Wo)   output slab for batch element n
    x = x_ref[0].astype(jnp.float32)                                 # (C*H, W)
    u = jnp.maximum(x * a_ref[...] + b_ref[...], 0.0)                # BN + ReLU
    r = jnp.dot(u, q_ref[...], preferred_element_type=jnp.float32)   # (C*H, Wo)
    o = jnp.dot(s_ref[...], r, preferred_element_type=jnp.float32)   # (C_out*Ho, Wo)
    o_ref[0] = o.astype(o_ref.dtype)


# ---------------------------------------------------------------------------
# Wrapper
# ---------------------------------------------------------------------------
def transition_forward(x_nchw, conv_w, gamma, beta):
    """x_nchw: (N, C, H, W); conv_w: (C_out, C, 1, 1); gamma/beta: (C,)."""
    N, C, H, W = x_nchw.shape
    C_out = conv_w.shape[0]
    assert H % 2 == 0 and W % 2 == 0, "avg_pool2d(2) needs even spatial dims"
    Ho, Wo = H // 2, W // 2
    CH = C * H

    # Free (contiguous) reshape: one 2-D slab per batch element.
    x3 = x_nchw.reshape(N, CH, W)

    # ---- Phase 1: global BN statistics (grid over N, resident accumulator) --
    row_sum, row_sq = pl.pallas_call(
        stats_kernel,
        out_shape=(jax.ShapeDtypeStruct((CH, 1), jnp.float32),
                   jax.ShapeDtypeStruct((CH, 1), jnp.float32)),
        grid=(N,),
        in_specs=[pl.BlockSpec((1, CH, W), lambda n: (n, 0, 0))],
        out_specs=(pl.BlockSpec((CH, 1), lambda n: (0, 0)),
                   pl.BlockSpec((CH, 1), lambda n: (0, 0))),
        compiler_params=pltpu.CompilerParams(
            dimension_semantics=("arbitrary",)),
    )(x3)

    # Tiny per-channel scalar math stays in the wrapper (C elements).
    count = float(N * H * W)
    sum_c = row_sum.reshape(C, H).sum(axis=1)
    sq_c = row_sq.reshape(C, H).sum(axis=1)
    mean = sum_c / count
    var = sq_c / count - mean * mean                 # one-pass biased variance
    inv_std = lax.rsqrt(var + EPS)
    a = gamma.astype(jnp.float32) * inv_std          # fused BN scale
    b = beta.astype(jnp.float32) - mean * a          # fused BN shift
    a_rep = jnp.repeat(a, H).reshape(CH, 1)
    b_rep = jnp.repeat(b, H).reshape(CH, 1)

    # Pooling matrices (avg_pool2d(2) == P @ img @ Q) and the conv+H-pool
    # operator S = kron(W_conv, P): S[o*Ho+i, c*H+h] = W[o,c] * P[i,h].
    P = jnp.repeat(jnp.eye(Ho, dtype=jnp.float32), 2, axis=1) * 0.5   # (Ho, H)
    Q = jnp.repeat(jnp.eye(Wo, dtype=jnp.float32), 2, axis=0) * 0.5   # (W, Wo)
    w2 = conv_w.reshape(C_out, C).astype(jnp.float32)
    S = jnp.kron(w2, P)                                               # (C_out*Ho, C*H)

    # ---- Phase 2: apply (grid over N, batch axis parallel for megacore) -----
    out3 = pl.pallas_call(
        apply_kernel,
        out_shape=jax.ShapeDtypeStruct((N, C_out * Ho, Wo), x_nchw.dtype),
        grid=(N,),
        in_specs=[
            pl.BlockSpec((1, CH, W), lambda n: (n, 0, 0)),
            pl.BlockSpec((CH, 1), lambda n: (0, 0)),
            pl.BlockSpec((CH, 1), lambda n: (0, 0)),
            pl.BlockSpec((C_out * Ho, CH), lambda n: (0, 0)),
            pl.BlockSpec((W, Wo), lambda n: (0, 0)),
        ],
        out_specs=pl.BlockSpec((1, C_out * Ho, Wo), lambda n: (n, 0, 0)),
        compiler_params=pltpu.CompilerParams(
            dimension_semantics=("parallel",)),
    )(x3, a_rep, b_rep, S, Q)

    # Free reshape back to NCHW of the pooled output.
    return out3.reshape(N, C_out, Ho, Wo)


# ---------------------------------------------------------------------------
# Pure-JAX reference (training-mode BN -> ReLU -> 1x1 conv -> avg_pool2d(2)).
# ---------------------------------------------------------------------------
def _reference(x, conv_w, gamma, beta):
    N, C, H, W = x.shape
    C_out = conv_w.shape[0]
    xf = x.astype(jnp.float32)
    mean = jnp.mean(xf, axis=(0, 2, 3), keepdims=True)
    var = jnp.mean((xf - mean) ** 2, axis=(0, 2, 3), keepdims=True)
    xn = (xf - mean) * lax.rsqrt(var + EPS)
    xn = xn * gamma.reshape(1, C, 1, 1) + beta.reshape(1, C, 1, 1)
    z = jnp.maximum(xn, 0.0)
    y = jnp.einsum("oc,nchw->nohw", conv_w.reshape(C_out, C).astype(jnp.float32), z)
    return y.reshape(N, C_out, H // 2, 2, W // 2, 2).mean(axis=(3, 5))


if __name__ == "__main__":
    # Small shapes consistent with Transition(in_planes=4, out_planes=8).
    N, C_in, H, W = 2, 4, 16, 16
    C_out = 8

    key = jax.random.PRNGKey(0)
    kx, kw, kg, kb = jax.random.split(key, 4)

    x = jax.random.normal(kx, (N, C_in, H, W), dtype=jnp.float32)
    bound = 1.0 / (C_in ** 0.5)  # torch kaiming-uniform bound for 1x1 conv
    conv_w = jax.random.uniform(kw, (C_out, C_in, 1, 1),
                                minval=-bound, maxval=bound, dtype=jnp.float32)
    # Non-trivial affine params to exercise the BN path (default torch init is
    # ones/zeros; any values are valid forward-pass parameters).
    gamma = 1.0 + 0.1 * jax.random.normal(kg, (C_in,), dtype=jnp.float32)
    beta = 0.1 * jax.random.normal(kb, (C_in,), dtype=jnp.float32)

    out = jax.block_until_ready(transition_forward(x, conv_w, gamma, beta))
    ref = jax.block_until_ready(_reference(x, conv_w, gamma, beta))

    assert out.shape == (N, C_out, H // 2, W // 2), out.shape
    assert jnp.allclose(out, ref, atol=1e-4, rtol=1e-4), float(
        jnp.max(jnp.abs(out - ref)))

    print("KERNEL_OK")
</pallas_src>

<mosaic_0001>
module attributes {stable_mosaic.version = 11 : i64} {
  func.func @stats_kernel(%arg0: i32, %arg1: memref<1x64x16xf32, #tpu.memory_space<vmem>>, %arg2: memref<64x1xf32, #tpu.memory_space<vmem>>, %arg3: memref<64x1xf32, #tpu.memory_space<vmem>>) attributes {dimension_semantics = [#tpu.dimension_semantics<arbitrary>], iteration_bounds = array<i64: 2>, scalar_prefetch = 0 : i64, scratch_operands = 0 : i64, tpu.core_type = #tpu.core_type<tc>, window_params = [{transform_indices = @transform_0, window_bounds = array<i64: 1, 64, 16>}, {pipeline_mode = #tpu.pipeline_mode<synchronous>, transform_indices = @transform_1, window_bounds = array<i64: 64, 1>}, {pipeline_mode = #tpu.pipeline_mode<synchronous>, transform_indices = @transform_2, window_bounds = array<i64: 64, 1>}]} {
    %c0 = arith.constant 0 : index
    %c0_0 = arith.constant 0 : index
    %c0_1 = arith.constant 0 : index
    %0 = vector.load %arg1[%c0, %c0_0, %c0_1] : memref<1x64x16xf32, #tpu.memory_space<vmem>>, vector<1x64x16xf32>
    %1 = vector.shape_cast %0 : vector<1x64x16xf32> to vector<64x16xf32>
    %cst = arith.constant dense<0.000000e+00> : vector<64xf32>
    %2 = vector.multi_reduction <add>, %1, %cst [1] : vector<64x16xf32> to vector<64xf32>
    %3 = vector.shape_cast %2 : vector<64xf32> to vector<64x1xf32>
    %4 = arith.mulf %1, %1 : vector<64x16xf32>
    %cst_2 = arith.constant dense<0.000000e+00> : vector<64xf32>
    %5 = vector.multi_reduction <add>, %4, %cst_2 [1] : vector<64x16xf32> to vector<64xf32>
    %6 = vector.shape_cast %5 : vector<64xf32> to vector<64x1xf32>
    %c0_i32 = arith.constant 0 : i32
    %7 = arith.cmpi eq, %arg0, %c0_i32 : i32
    %8 = arith.extui %7 : i1 to i32
    %c0_i32_3 = arith.constant 0 : i32
    %9 = arith.cmpi ne, %8, %c0_i32_3 : i32
    scf.if %9 {
      %cst_12 = arith.constant 0.000000e+00 : f32
      %16 = vector.broadcast %cst_12 : f32 to vector<64x1xf32>
      %c0_13 = arith.constant 0 : index
      %c0_14 = arith.constant 0 : index
      %17 = vector.load %arg2[%c0_13, %c0_14] : memref<64x1xf32, #tpu.memory_space<vmem>>, vector<64x1xf32>
      tpu.vector_store %arg2[%c0_13, %c0_14], %16 {strides = array<i32>} : memref<64x1xf32, #tpu.memory_space<vmem>>, vector<64x1xf32>,
      %cst_15 = arith.constant 0.000000e+00 : f32
      %18 = vector.broadcast %cst_15 : f32 to vector<64x1xf32>
      %c0_16 = arith.constant 0 : index
      %c0_17 = arith.constant 0 : index
      %19 = vector.load %arg3[%c0_16, %c0_17] : memref<64x1xf32, #tpu.memory_space<vmem>>, vector<64x1xf32>
      tpu.vector_store %arg3[%c0_16, %c0_17], %18 {strides = array<i32>} : memref<64x1xf32, #tpu.memory_space<vmem>>, vector<64x1xf32>,
    } else {
    }
    %c0_4 = arith.constant 0 : index
    %c0_5 = arith.constant 0 : index
    %10 = vector.load %arg2[%c0_4, %c0_5] : memref<64x1xf32, #tpu.memory_space<vmem>>, vector<64x1xf32>
    %11 = arith.addf %10, %3 : vector<64x1xf32>
    %c0_6 = arith.constant 0 : index
    %c0_7 = arith.constant 0 : index
    %12 = vector.load %arg2[%c0_6, %c0_7] : memref<64x1xf32, #tpu.memory_space<vmem>>, vector<64x1xf32>
    tpu.vector_store %arg2[%c0_6, %c0_7], %11 {strides = array<i32>} : memref<64x1xf32, #tpu.memory_space<vmem>>, vector<64x1xf32>,
    %c0_8 = arith.constant 0 : index
    %c0_9 = arith.constant 0 : index
    %13 = vector.load %arg3[%c0_8, %c0_9] : memref<64x1xf32, #tpu.memory_space<vmem>>, vector<64x1xf32>
    %14 = arith.addf %13, %6 : vector<64x1xf32>
    %c0_10 = arith.constant 0 : index
    %c0_11 = arith.constant 0 : index
    %15 = vector.load %arg3[%c0_10, %c0_11] : memref<64x1xf32, #tpu.memory_space<vmem>>, vector<64x1xf32>
    tpu.vector_store %arg3[%c0_10, %c0_11], %14 {strides = array<i32>} : memref<64x1xf32, #tpu.memory_space<vmem>>, vector<64x1xf32>,
    return
  }
  func.func @transform_0(%arg0: i32) -> (i32, i32, i32) {
    %c0_i32 = arith.constant 0 : i32
    %c0_i32_0 = arith.constant 0 : i32
    %c0_i32_1 = arith.constant 0 : i32
    return %arg0, %c0_i32, %c0_i32_0 : i32, i32, i32
  }
  func.func @transform_1(%arg0: i32) -> (i32, i32) {
    %c0_i32 = arith.constant 0 : i32
    %c0_i32_0 = arith.constant 0 : i32
    %c0_i32_1 = arith.constant 0 : i32
    return %c0_i32, %c0_i32_0 : i32, i32
  }
  func.func @transform_2(%arg0: i32) -> (i32, i32) {
    %c0_i32 = arith.constant 0 : i32
    %c0_i32_0 = arith.constant 0 : i32
    %c0_i32_1 = arith.constant 0 : i32
    return %c0_i32, %c0_i32_0 : i32, i32
  }
}

</mosaic_0001>

<llo_original>
// kernel: tpu_custom_call.1
$region0: #{tpu_custom_call.1}
  #allocation0 [shape = 'u32[]', space=smem, size = 0x4, offset = 0x4, fixed_abs, tag = 'smem constant byte address 0x4 - core index']
  #allocation1 [shape = 'u32[144,128]{1,0:T(1,128)}', space=vmem, size = 0x12000, scoped, tag = 'internal scratch']
  %s0 = inlined_call_operand.vmem [shape: f32[2,64,16], index: 0, kind: input, shape index: {}]
  %s1 = inlined_call_operand.vmem [shape: f32[64,1], index: 1, kind: output, shape index: {0}]
  %s2 = inlined_call_operand.vmem [shape: f32[64,1], index: 2, kind: output, shape index: {1}]
  %3 = xla_tuple %s1, %s2
  %s4 = sld [smem:[#allocation0]]
  $region49: #{tpu_custom_call.1} parent=0
    _
  %s6 = ssub.s32 1, %s4
  %s7 = scalar_select 0, %s6, %s4
  loop: start=0, step=1, limit=4
  $region2: #{tpu_custom_call.1} parent=0 // loop_pre_header
    _
  $region3: #{tpu_custom_call.1} parent=0 // loop_header
    %s9 = sphi 0, %s13
    %p10 = scmp.ge.s32.totalorder %s9, 4
    %s19 = sphi 0, %s21
    %s22 = sphi 0, %s19
    %s23 = sphi 0, %s22
    %s39 = sphi 0, %s23
    %s43 = sphi 0, %s43
    %s45 = sphi 0, %s43
    %s46 = sphi 0, %s45
    %s60 = sphi 0, %s46
    %s64 = sphi 0, %s64
    %s66 = sphi 0, %s64
    %s67 = sphi 0, %s66
    %s81 = sphi 0, %s67
  $region4: #{tpu_custom_call.1} parent=0 // loop_header_branch
    %12 = sbr.rel (%p10) target = $region8
  $region5: #{tpu_custom_call.1} parent=0 // loop_body
    %s14 = ssub.s32 %s9, 1
    %s15 = ssub.s32 %s9, 2
    %s16 = sadd.s32 %s9, 1
    %s17 = ssub.s32 %s9, %s16
    %p18 = scmp.eq.s32.totalorder %s17, 0
    %s20 = sadd.s32 %s19, 1
    %s21 = scalar_select %p18, %s19, %s20
    %p24 = pneg %p18
    %p25 = scmp.eq.s32.totalorder %s9, 1
    %p26 = por %p24, %p25
    %p27 = scmp.ne.s32.totalorder %s19, %s22
    %p28 = scmp.eq.s32.totalorder %s9, 0
    %p29 = por %p27, %p28
    %p30 = scmp.ne.s32.totalorder %s19, %s22
    %p31 = scmp.eq.s32.totalorder %s14, 1
    %p32 = por %p30, %p31
    %p33 = scmp.ne.s32.totalorder %s22, %s23
    %p34 = scmp.eq.s32.totalorder %s14, 0
    %p35 = por %p33, %p34
    %p36 = scmp.ne.s32.totalorder %s22, %s23
    %p37 = scmp.eq.s32.totalorder %s15, 1
    %p38 = por %p36, %p37
    %p40 = scmp.ne.s32.totalorder %s23, %s39
    %p41 = scmp.eq.s32.totalorder %s15, 0
    %p42 = por %p40, %p41
    %s44 = sadd.s32 %s43, 1
    %p47 = scmp.eq.s32.totalorder %s9, 1
    %p48 = scmp.ne.s32.totalorder %s43, %s45
    %p49 = scmp.eq.s32.totalorder %s9, 0
    %p50 = por %p48, %p49
    %p51 = scmp.ne.s32.totalorder %s43, %s45
    %p52 = scmp.eq.s32.totalorder %s14, 1
    %p53 = por %p51, %p52
    %p54 = scmp.ne.s32.totalorder %s45, %s46
    %p55 = scmp.eq.s32.totalorder %s14, 0
    %p56 = por %p54, %p55
    %p57 = scmp.ne.s32.totalorder %s45, %s46
    %p58 = scmp.eq.s32.totalorder %s15, 1
    %p59 = por %p57, %p58
    %p61 = scmp.ne.s32.totalorder %s46, %s60
    %p62 = scmp.eq.s32.totalorder %s15, 0
    %p63 = por %p61, %p62
    %s65 = sadd.s32 %s64, 1
    %p68 = scmp.eq.s32.totalorder %s9, 1
    %p69 = scmp.ne.s32.totalorder %s64, %s66
    %p70 = scmp.eq.s32.totalorder %s9, 0
    %p71 = por %p69, %p70
    %p72 = scmp.ne.s32.totalorder %s64, %s66
    %p73 = scmp.eq.s32.totalorder %s14, 1
    %p74 = por %p72, %p73
    %p75 = scmp.ne.s32.totalorder %s66, %s67
    %p76 = scmp.eq.s32.totalorder %s14, 0
    %p77 = por %p75, %p76
    %p78 = scmp.ne.s32.totalorder %s66, %s67
    %p79 = scmp.eq.s32.totalorder %s15, 1
    %p80 = por %p78, %p79
    %p82 = scmp.ne.s32.totalorder %s67, %s81
    %p83 = scmp.eq.s32.totalorder %s15, 0
    %p84 = por %p82, %p83
    %p85 = scmp.le.s32.totalorder 1, %s9
    %p86 = scmp.lt.s32.totalorder %s9, 3
    %p87 = pnand %p85, %p86
    %p88 = pneg %p87
    // Predicated region
    $region9: #{tpu_custom_call.1} parent=5 // pred_check
      _
    $region10: #{tpu_custom_call.1} parent=5 // pred_check_branch
      %90 = sbr.rel (%p87) target = $region12
    $region11: #{tpu_custom_call.1} parent=5 // pred_region
      %s91 = ssub.s32 %s9, 1
    $region12: #{tpu_custom_call.1} parent=5 // pred_fallthru
      _
    %p92 = scmp.lt.s32.totalorder %s9, 2
    // Predicated region
    $region13: #{tpu_custom_call.1} parent=5 // pred_check
      %p93 = pneg %p92
    $region14: #{tpu_custom_call.1} parent=5 // pred_check_branch
      %95 = sbr.rel (%p93) target = $region16
    $region15: #{tpu_custom_call.1} parent=5 // pred_region
      // Predicated region
      $region17: #{tpu_custom_call.1} parent=15 // pred_check
        %p96 = pneg %p29
      $region18: #{tpu_custom_call.1} parent=15 // pred_check_branch
        %98 = sbr.rel (%p96) target = $region20
      $region19: #{tpu_custom_call.1} parent=15 // pred_region
        %p99 = scmp.lt.s32.totalorder %s9, 1
        %s100 = scalar_select %p99, %s9, 1
        %s101 = smul.addr %s100, 8
        %s102 = smul.addr %s101, 8
        %s103 = scalar_lea.vmem %s0, %s102
      $region20: #{tpu_custom_call.1} parent=15 // pred_fallthru
        _
    $region16: #{tpu_custom_call.1} parent=5 // pred_fallthru
      _
    %p104 = scmp.le.s32.totalorder 1, %s9
    %p105 = scmp.lt.s32.totalorder %s9, 3
    %p106 = pnand %p104, %p105
    %p107 = pneg %p106
    // Predicated region
    $region21: #{tpu_custom_call.1} parent=5 // pred_check
      _
    $region22: #{tpu_custom_call.1} parent=5 // pred_check_branch
      %109 = sbr.rel (%p106) target = $region24
    $region23: #{tpu_custom_call.1} parent=5 // pred_region
      %s110 = ssub.s32 %s9, 1
      %p111 = scmp.lt.s32.totalorder %s14, 1
      %s112 = scalar_select %p111, %s14, 1
      %s113 = smul.addr %s112, 8
      %s114 = smul.addr %s113, 8
      %s115 = scalar_lea.vmem %s0, %s114
      %p116 = pneg %p35
      %p117 = pneg %p32
      %p118 = pneg %p56
      %p119 = pneg %p53
      %p120 = pneg %p77
      %p121 = pneg %p74
      %p122 = scmp.lt.s32.totalorder %s14, 1
      %s123 = scalar_select %p122, %s14, 1
      %s124 = smul.addr %s123, 8
      %s125 = smul.addr %s124, 8
      %s126 = scalar_lea.vmem %s0, %s125
      %v127 = vld [vmem:[%s126] sm:$0xff]
      %v128 = vld [vmem:[%s126 + $0x8] sm:$0xff]
      %v129 = vld [vmem:[%s126 + $0x10] sm:$0xff]
      %v130 = vld [vmem:[%s126 + $0x18] sm:$0xff]
      %v131 = vld [vmem:[%s126 + $0x20] sm:$0xff]
      %v132 = vld [vmem:[%s126 + $0x28] sm:$0xff]
      %v133 = vld [vmem:[%s126 + $0x30] sm:$0xff]
      %v134 = vld [vmem:[%s126 + $0x38] sm:$0xff]
      %vm135 = vcmask 130048
      %v136 = vsel %vm135, %v127, 0.0
      %137 = vadd.xlane.f32.xlu0 %v136
      %v138 = vpop.xlane.xlu0 %137
      %v139 = vsel %vm135, %v128, 0.0
      %140 = vadd.xlane.f32.xlu0 %v139
      %v141 = vpop.xlane.xlu0 %140
      %v142 = vsel %vm135, %v129, 0.0
      %143 = vadd.xlane.f32.xlu0 %v142
      %v144 = vpop.xlane.xlu0 %143
      %v145 = vsel %vm135, %v130, 0.0
      %146 = vadd.xlane.f32.xlu0 %v145
      %v147 = vpop.xlane.xlu0 %146
      %v148 = vsel %vm135, %v131, 0.0
      %149 = vadd.xlane.f32.xlu0 %v148
      %v150 = vpop.xlane.xlu0 %149
      %v151 = vsel %vm135, %v132, 0.0
      %152 = vadd.xlane.f32.xlu0 %v151
      %v153 = vpop.xlane.xlu0 %152
      %v154 = vsel %vm135, %v133, 0.0
      %155 = vadd.xlane.f32.xlu0 %v154
      %v156 = vpop.xlane.xlu0 %155
      %v157 = vsel %vm135, %v134, 0.0
      %158 = vadd.xlane.f32.xlu0 %v157
      %v159 = vpop.xlane.xlu0 %158
      %v160 = vmul.f32 %v127, %v127
      %v161 = vmul.f32 %v128, %v128
      %v162 = vmul.f32 %v129, %v129
      %v163 = vmul.f32 %v130, %v130
      %v164 = vmul.f32 %v131, %v131
      %v165 = vmul.f32 %v132, %v132
      %v166 = vmul.f32 %v133, %v133
      %v167 = vmul.f32 %v134, %v134
      %v168 = vsel %vm135, %v160, 0.0
      %169 = vadd.xlane.f32.xlu0 %v168
      %v170 = vpop.xlane.xlu0 %169
      %v171 = vsel %vm135, %v161, 0.0
      %172 = vadd.xlane.f32.xlu0 %v171
      %v173 = vpop.xlane.xlu0 %172
      %v174 = vsel %vm135, %v162, 0.0
      %175 = vadd.xlane.f32.xlu0 %v174
      %v176 = vpop.xlane.xlu0 %175
      %v177 = vsel %vm135, %v163, 0.0
      %178 = vadd.xlane.f32.xlu0 %v177
      %v179 = vpop.xlane.xlu0 %178
      %v180 = vsel %vm135, %v164, 0.0
      %181 = vadd.xlane.f32.xlu0 %v180
      %v182 = vpop.xlane.xlu0 %181
      %v183 = vsel %vm135, %v165, 0.0
      %184 = vadd.xlane.f32.xlu0 %v183
      %v185 = vpop.xlane.xlu0 %184
      %v186 = vsel %vm135, %v166, 0.0
      %187 = vadd.xlane.f32.xlu0 %v186
      %v188 = vpop.xlane.xlu0 %187
      %v189 = vsel %vm135, %v167, 0.0
      %190 = vadd.xlane.f32.xlu0 %v189
      %v191 = vpop.xlane.xlu0 %190
      %p192 = scmp.eq.s32.totalorder %s14, 0
      // Predicated region
      $region25: #{tpu_custom_call.1} parent=23 // pred_check
        %p193 = pneg %p192
      $region26: #{tpu_custom_call.1} parent=23 // pred_check_branch
        %195 = sbr.rel (%p193) target = $region28
      $region27: #{tpu_custom_call.1} parent=23 // pred_region
        %vm196 = vcmask 7168
        %197 = vst.msk [vmem:[%s1] sm:$0xff] %vm196, 0.0
        %198 = vst.msk [vmem:[%s1 + $0x8] sm:$0xff] %vm196, 0.0
        %199 = vst.msk [vmem:[%s1 + $0x10] sm:$0xff] %vm196, 0.0
        %200 = vst.msk [vmem:[%s1 + $0x18] sm:$0xff] %vm196, 0.0
        %201 = vst.msk [vmem:[%s1 + $0x20] sm:$0xff] %vm196, 0.0
        %202 = vst.msk [vmem:[%s1 + $0x28] sm:$0xff] %vm196, 0.0
        %203 = vst.msk [vmem:[%s1 + $0x30] sm:$0xff] %vm196, 0.0
        %204 = vst.msk [vmem:[%s1 + $0x38] sm:$0xff] %vm196, 0.0
        %205 = vst.msk [vmem:[%s2] sm:$0xff] %vm196, 0.0
        %206 = vst.msk [vmem:[%s2 + $0x8] sm:$0xff] %vm196, 0.0
        %207 = vst.msk [vmem:[%s2 + $0x10] sm:$0xff] %vm196, 0.0
        %208 = vst.msk [vmem:[%s2 + $0x18] sm:$0xff] %vm196, 0.0
        %209 = vst.msk [vmem:[%s2 + $0x20] sm:$0xff] %vm196, 0.0
        %210 = vst.msk [vmem:[%s2 + $0x28] sm:$0xff] %vm196, 0.0
        %211 = vst.msk [vmem:[%s2 + $0x30] sm:$0xff] %vm196, 0.0
        %212 = vst.msk [vmem:[%s2 + $0x38] sm:$0xff] %vm196, 0.0
      $region28: #{tpu_custom_call.1} parent=23 // pred_fallthru
        _
      %v213 = vld [vmem:[%s1] sm:$0xff]
      %v214 = vld [vmem:[%s1 + $0x8] sm:$0xff]
      %v215 = vld [vmem:[%s1 + $0x10] sm:$0xff]
      %v216 = vld [vmem:[%s1 + $0x18] sm:$0xff]
      %v217 = vld [vmem:[%s1 + $0x20] sm:$0xff]
      %v218 = vld [vmem:[%s1 + $0x28] sm:$0xff]
      %v219 = vld [vmem:[%s1 + $0x30] sm:$0xff]
      %v220 = vld [vmem:[%s1 + $0x38] sm:$0xff]
      %v221 = vadd.f32 %v213, %v138
      %v222 = vadd.f32 %v214, %v141
      %v223 = vadd.f32 %v215, %v144
      %v224 = vadd.f32 %v216, %v147
      %v225 = vadd.f32 %v217, %v150
      %v226 = vadd.f32 %v218, %v153
      %v227 = vadd.f32 %v219, %v156
      %v228 = vadd.f32 %v220, %v159
      %vm229 = vcmask 7168
      %230 = vst.msk [vmem:[%s1] sm:$0xff] %vm229, %v221
      %231 = vst.msk [vmem:[%s1 + $0x8] sm:$0xff] %vm229, %v222
      %232 = vst.msk [vmem:[%s1 + $0x10] sm:$0xff] %vm229, %v223
      %233 = vst.msk [vmem:[%s1 + $0x18] sm:$0xff] %vm229, %v224
      %234 = vst.msk [vmem:[%s1 + $0x20] sm:$0xff] %vm229, %v225
      %235 = vst.msk [vmem:[%s1 + $0x28] sm:$0xff] %vm229, %v226
      %236 = vst.msk [vmem:[%s1 + $0x30] sm:$0xff] %vm229, %v227
      %237 = vst.msk [vmem:[%s1 + $0x38] sm:$0xff] %vm229, %v228
      %v238 = vld [vmem:[%s2] sm:$0xff]
      %v239 = vld [vmem:[%s2 + $0x8] sm:$0xff]
      %v240 = vld [vmem:[%s2 + $0x10] sm:$0xff]
      %v241 = vld [vmem:[%s2 + $0x18] sm:$0xff]
      %v242 = vld [vmem:[%s2 + $0x20] sm:$0xff]
      %v243 = vld [vmem:[%s2 + $0x28] sm:$0xff]
      %v244 = vld [vmem:[%s2 + $0x30] sm:$0xff]
      %v245 = vld [vmem:[%s2 + $0x38] sm:$0xff]
      %v246 = vadd.f32 %v238, %v170
      %v247 = vadd.f32 %v239, %v173
      %v248 = vadd.f32 %v240, %v176
      %v249 = vadd.f32 %v241, %v179
      %v250 = vadd.f32 %v242, %v182
      %v251 = vadd.f32 %v243, %v185
      %v252 = vadd.f32 %v244, %v188
      %v253 = vadd.f32 %v245, %v191
      %254 = vst.msk [vmem:[%s2] sm:$0xff] %vm229, %v246
      %255 = vst.msk [vmem:[%s2 + $0x8] sm:$0xff] %vm229, %v247
      %256 = vst.msk [vmem:[%s2 + $0x10] sm:$0xff] %vm229, %v248
      %257 = vst.msk [vmem:[%s2 + $0x18] sm:$0xff] %vm229, %v249
      %258 = vst.msk [vmem:[%s2 + $0x20] sm:$0xff] %vm229, %v250
      %259 = vst.msk [vmem:[%s2 + $0x28] sm:$0xff] %vm229, %v251
      %260 = vst.msk [vmem:[%s2 + $0x30] sm:$0xff] %vm229, %v252
      %261 = vst.msk [vmem:[%s2 + $0x38] sm:$0xff] %vm229, %v253
      // Predicated region
      $region29: #{tpu_custom_call.1} parent=23 // pred_check
        %p262 = pneg %p53
      $region30: #{tpu_custom_call.1} parent=23 // pred_check_branch
        %264 = sbr.rel (%p262) target = $region32
      $region31: #{tpu_custom_call.1} parent=23 // pred_region
        _
      $region32: #{tpu_custom_call.1} parent=23 // pred_fallthru
        _
      // Predicated region
      $region33: #{tpu_custom_call.1} parent=23 // pred_check
        %p265 = pneg %p74
      $region34: #{tpu_custom_call.1} parent=23 // pred_check_branch
        %267 = sbr.rel (%p265) target = $region36
      $region35: #{tpu_custom_call.1} parent=23 // pred_region
        _
      $region36: #{tpu_custom_call.1} parent=23 // pred_fallthru
        _
      // Predicated region
      $region37: #{tpu_custom_call.1} parent=23 // pred_check
        %p268 = pneg %p53
      $region38: #{tpu_custom_call.1} parent=23 // pred_check_branch
        %270 = sbr.rel (%p268) target = $region40
      $region39: #{tpu_custom_call.1} parent=23 // pred_region
        _
      $region40: #{tpu_custom_call.1} parent=23 // pred_fallthru
        _
      // Predicated region
      $region41: #{tpu_custom_call.1} parent=23 // pred_check
        %p271 = pneg %p74
      $region42: #{tpu_custom_call.1} parent=23 // pred_check_branch
        %273 = sbr.rel (%p271) target = $region44
      $region43: #{tpu_custom_call.1} parent=23 // pred_region
        _
      $region44: #{tpu_custom_call.1} parent=23 // pred_fallthru
        _
    $region24: #{tpu_custom_call.1} parent=5 // pred_fallthru
      _
    %p274 = scmp.le.s32.totalorder 2, %s9
    // Predicated region
    $region45: #{tpu_custom_call.1} parent=5 // pred_check
      %p275 = pneg %p274
    $region46: #{tpu_custom_call.1} parent=5 // pred_check_branch
      %277 = sbr.rel (%p275) target = $region48
    $region47: #{tpu_custom_call.1} parent=5 // pred_region
      %s278 = ssub.s32 %s9, 2
    $region48: #{tpu_custom_call.1} parent=5 // pred_fallthru
      _
  $region6: #{tpu_custom_call.1} parent=0 // loop_footer
    %s13 = sadd.s32 1, %s9
  $region7: #{tpu_custom_call.1} parent=0 // loop_footer_branch
    %8 = sbr.rel target = $region3
  $region8: #{tpu_custom_call.1} parent=0 // loop_exit
    _

</llo_original>
